<compile_context>
chip_gen: v7x
topology: tpu7x:2x2x1
jax: 0.10.0
libtpu: 0.0.40
codegen_flags: <defaults>
</compile_context>

<pallas_src>
import jax
import jax.numpy as jnp
from jax.experimental import pallas as pl
from jax.experimental.pallas import tpu as pltpu


def _round_up(v, m):
    return (v + m - 1) // m * m


def _csl_kernel(gate_ref, fbias_ref, x_ref, w_ref, o_ref):
    """One grid step: (Bt, TM) rows of the main Linear + modulation epilogue.

    gate_ref / fbias_ref: (Bt, 1, Do)  float32 (precomputed hyper-net)
    x_ref:                (Bt, TM, Di)
    w_ref:                (Di, Do)     (Linear weight, (in, out) layout)
    o_ref:                (Bt, TM, Do)
    """
    bt = x_ref.shape[0]
    # Small static loop over the batches packed into this tile; each dot is a
    # 2-D (TM, Di) @ (Di, Do) MXU matmul with f32 accumulation.  The kernel is
    # HBM-bound, so several small dots per step are fine as long as each grid
    # step moves a large slab of x / out through VMEM.
    for b in range(bt):
        h = jnp.dot(x_ref[b], w_ref[...], preferred_element_type=jnp.float32)
        o_ref[b] = (h * gate_ref[b] + fbias_ref[b]).astype(o_ref.dtype)


def _vmem_budget_bytes():
    try:
        cap = int(pltpu.get_tpu_info().vmem_capacity_bytes)
    except Exception:
        cap = 64 * 1024 * 1024  # v7x physical VMEM -- safe fallback everywhere
    return max(16 * 1024 * 1024, int(0.85 * cap))


def concat_squash_linear(ctx, x, w_layer, b_layer, w_gate, b_gate, w_bias,
                         *, batch_tile=None, row_tile=None, target_rows=512,
                         max_batch_tile=32):
    """ctx: (B,1,Dc), x: (B,N,Di).  Weights in (in,out) layout, biases (1,out)."""
    B, N, Di = x.shape
    Do = w_layer.shape[-1]

    # ---- Hyper-net hoisted out of the kernel: tiny (B,1,Do) f32 matmuls.
    # fused_bias folds the main Linear's bias through the gate:
    #   (x@W + b) * gate + ctx@Wb  ==  (x@W) * gate + (b * gate + ctx@Wb)
    ctx32 = ctx.astype(jnp.float32)
    gate = jax.nn.sigmoid(ctx32 @ w_gate.astype(jnp.float32)
                          + b_gate.astype(jnp.float32))                    # (B,1,Do)
    fbias = (b_layer.astype(jnp.float32) * gate
             + ctx32 @ w_bias.astype(jnp.float32))                         # (B,1,Do)

    # ---- Tile selection: pack ~target_rows effective rows per grid step
    # without ever padding x.  Row tile must be a multiple of 8 or the full N.
    if row_tile is None:
        TM = N if N <= target_rows else _round_up(min(target_rows, N), 8)
    else:
        TM = min(row_tile, N)
        if TM < N and TM % 8 != 0:
            TM = min(_round_up(TM, 8), N)
    if TM < N and TM % 8 != 0:
        TM = N

    if batch_tile is None:
        Bt = 1 if TM >= target_rows else min(B, max_batch_tile,
                                             max(1, target_rows // TM))
    else:
        Bt = max(1, min(batch_tile, B))

    # ---- VMEM fit check (double-buffered tiles + weight), generation aware.
    x_isz = x.dtype.itemsize
    w_isz = w_layer.dtype.itemsize

    def est(bt, tm):
        tiles = bt * tm * Di * x_isz + bt * tm * Do * x_isz + 2 * bt * Do * 4
        return 2 * (tiles + Di * Do * w_isz)

    budget = _vmem_budget_bytes()
    while est(Bt, TM) > budget and (Bt > 1 or TM > 8):
        if Bt > 1:
            Bt = max(1, Bt // 2)
        else:
            new_tm = max(8, _round_up(TM // 2, 8))
            if new_tm >= TM:
                break
            TM = new_tm
    vmem_limit = int(min(budget, max(32 * 1024 * 1024, 2 * est(Bt, TM))))

    grid = (pl.cdiv(B, Bt), pl.cdiv(N, TM))

    out = pl.pallas_call(
        _csl_kernel,
        out_shape=jax.ShapeDtypeStruct((B, N, Do), x.dtype),
        grid_spec=pltpu.PrefetchScalarGridSpec(
            num_scalar_prefetch=0,
            grid=grid,
            in_specs=[
                pl.BlockSpec((Bt, 1, Do), lambda bi, ni: (bi, 0, 0)),     # gate
                pl.BlockSpec((Bt, 1, Do), lambda bi, ni: (bi, 0, 0)),     # fused bias
                pl.BlockSpec((Bt, TM, Di), lambda bi, ni: (bi, ni, 0)),   # x rows
                pl.BlockSpec((Di, Do), lambda bi, ni: (0, 0)),            # W_layer
            ],
            out_specs=pl.BlockSpec((Bt, TM, Do), lambda bi, ni: (bi, ni, 0)),
        ),
        compiler_params=pltpu.CompilerParams(
            # No cross-step carry (hyper-net hoisted), so both grid axes are
            # independent -> megacore / dual-TC shardable.
            dimension_semantics=("parallel", "parallel"),
            vmem_limit_bytes=vmem_limit,
        ),
    )(gate, fbias, x, w_layer)
    return out


def _init_linear(key, fan_in, fan_out, with_bias=True):
    # Mimic torch.nn.Linear default init: U(-1/sqrt(fan_in), 1/sqrt(fan_in))
    kw, kb = jax.random.split(key)
    bound = 1.0 / jnp.sqrt(fan_in)
    w = jax.random.uniform(kw, (fan_in, fan_out), jnp.float32, -bound, bound)
    if with_bias:
        b = jax.random.uniform(kb, (1, fan_out), jnp.float32, -bound, bound)
        return w, b
    return w, None


def reference(ctx, x, w_layer, b_layer, w_gate, b_gate, w_bias):
    gate = jax.nn.sigmoid(ctx @ w_gate + b_gate)
    bias = ctx @ w_bias
    return (x @ w_layer + b_layer) * gate + bias


if __name__ == "__main__":
    dim_in, dim_out, dim_ctx = 32, 64, 16
    key = jax.random.PRNGKey(0)
    keys = jax.random.split(key, 9)

    w_layer, b_layer = _init_linear(keys[0], dim_in, dim_out, with_bias=True)
    w_gate, b_gate = _init_linear(keys[1], dim_ctx, dim_out, with_bias=True)
    w_bias, _ = _init_linear(keys[2], dim_ctx, dim_out, with_bias=False)

    # Case 1: typical small MID shape -- one grid step covers all batches/rows.
    B, N = 2, 12
    ctx = jax.random.normal(keys[3], (B, 1, dim_ctx), jnp.float32)
    x = jax.random.normal(keys[4], (B, N, dim_in), jnp.float32)
    out = concat_squash_linear(ctx, x, w_layer, b_layer, w_gate, b_gate, w_bias)
    out = jax.block_until_ready(out)
    ref = reference(ctx, x, w_layer, b_layer, w_gate, b_gate, w_bias)
    assert out.shape == (B, N, dim_out), out.shape
    assert jnp.allclose(out, ref, atol=1e-4, rtol=1e-4), \
        float(jnp.max(jnp.abs(out - ref)))

    # Case 2: batch tiling with a partial boundary batch block (B=7, Bt=4).
    B2, N2 = 7, 20
    ctx2 = jax.random.normal(keys[5], (B2, 1, dim_ctx), jnp.float32)
    x2 = jax.random.normal(keys[6], (B2, N2, dim_in), jnp.float32)
    out2 = concat_squash_linear(ctx2, x2, w_layer, b_layer, w_gate, b_gate,
                                w_bias, batch_tile=4)
    out2 = jax.block_until_ready(out2)
    ref2 = reference(ctx2, x2, w_layer, b_layer, w_gate, b_gate, w_bias)
    assert out2.shape == (B2, N2, dim_out), out2.shape
    assert jnp.allclose(out2, ref2, atol=1e-4, rtol=1e-4), \
        float(jnp.max(jnp.abs(out2 - ref2)))

    # Case 3: bf16 activations/weights (halved HBM traffic) + row tiling with a
    # partial boundary row block (N=40, TM=16); epilogue stays in f32.
    B3, N3 = 3, 40
    ctx3 = jax.random.normal(keys[7], (B3, 1, dim_ctx), jnp.float32)
    x3 = jax.random.normal(keys[8], (B3, N3, dim_in), jnp.float32).astype(jnp.bfloat16)
    w_layer_bf = w_layer.astype(jnp.bfloat16)
    out3 = concat_squash_linear(ctx3, x3, w_layer_bf, b_layer, w_gate, b_gate,
                                w_bias, row_tile=16)
    out3 = jax.block_until_ready(out3)
    ref3 = reference(ctx3, x3.astype(jnp.float32), w_layer_bf.astype(jnp.float32),
                     b_layer, w_gate, b_gate, w_bias)
    assert out3.shape == (B3, N3, dim_out), out3.shape
    assert jnp.allclose(out3.astype(jnp.float32), ref3, atol=5e-2, rtol=5e-2), \
        float(jnp.max(jnp.abs(out3.astype(jnp.float32) - ref3)))

    print("KERNEL_OK")
</pallas_src>

<mosaic_0001>
module attributes {stable_mosaic.version = 11 : i64} {
  func.func @_csl_kernel(%arg0: i32, %arg1: i32, %arg2: memref<2x1x64xf32, #tpu.memory_space<vmem>>, %arg3: memref<2x1x64xf32, #tpu.memory_space<vmem>>, %arg4: memref<2x12x32xf32, #tpu.memory_space<vmem>>, %arg5: memref<32x64xf32, #tpu.memory_space<vmem>>, %arg6: memref<2x12x64xf32, #tpu.memory_space<vmem>>) attributes {dimension_semantics = [#tpu.dimension_semantics<parallel>, #tpu.dimension_semantics<parallel>], iteration_bounds = array<i64: 1, 1>, scalar_prefetch = 0 : i64, scratch_operands = 0 : i64, tpu.core_type = #tpu.core_type<tc>, window_params = [{transform_indices = @transform_0, window_bounds = array<i64: 2, 1, 64>}, {transform_indices = @transform_1, window_bounds = array<i64: 2, 1, 64>}, {transform_indices = @transform_2, window_bounds = array<i64: 2, 12, 32>}, {pipeline_mode = #tpu.pipeline_mode<synchronous>, transform_indices = @transform_3, window_bounds = array<i64: 32, 64>}, {transform_indices = @transform_4, window_bounds = array<i64: 2, 12, 64>}]} {
    %c0 = arith.constant 0 : index
    %c0_0 = arith.constant 0 : index
    %c0_1 = arith.constant 0 : index
    %0 = vector.load %arg4[%c0, %c0_0, %c0_1] : memref<2x12x32xf32, #tpu.memory_space<vmem>>, vector<1x12x32xf32>
    %1 = vector.shape_cast %0 : vector<1x12x32xf32> to vector<12x32xf32>
    %c0_2 = arith.constant 0 : index
    %c0_3 = arith.constant 0 : index
    %2 = vector.load %arg5[%c0_2, %c0_3] : memref<32x64xf32, #tpu.memory_space<vmem>>, vector<32x64xf32>
    %cst = arith.constant dense<0.000000e+00> : vector<12x64xf32>
    %3 = tpu.matmul %1, %2, %cst {dimension_numbers = #tpu.dot_dimension_numbers<[1], [0], [0], [1], [0, 0, 1, 1], [], []>} : vector<12x32xf32>, vector<32x64xf32>, vector<12x64xf32> -> vector<12x64xf32>
    %c0_4 = arith.constant 0 : index
    %c0_5 = arith.constant 0 : index
    %c0_6 = arith.constant 0 : index
    %4 = vector.load %arg2[%c0_4, %c0_5, %c0_6] : memref<2x1x64xf32, #tpu.memory_space<vmem>>, vector<1x1x64xf32>
    %5 = vector.shape_cast %4 : vector<1x1x64xf32> to vector<1x64xf32>
    %6 = vector.broadcast %5 : vector<1x64xf32> to vector<12x64xf32>
    %7 = arith.mulf %3, %6 : vector<12x64xf32>
    %c0_7 = arith.constant 0 : index
    %c0_8 = arith.constant 0 : index
    %c0_9 = arith.constant 0 : index
    %8 = vector.load %arg3[%c0_7, %c0_8, %c0_9] : memref<2x1x64xf32, #tpu.memory_space<vmem>>, vector<1x1x64xf32>
    %9 = vector.shape_cast %8 : vector<1x1x64xf32> to vector<1x64xf32>
    %10 = vector.broadcast %9 : vector<1x64xf32> to vector<12x64xf32>
    %11 = arith.addf %7, %10 : vector<12x64xf32>
    %c0_10 = arith.constant 0 : index
    %c0_11 = arith.constant 0 : index
    %c0_12 = arith.constant 0 : index
    %12 = vector.load %arg6[%c0_10, %c0_11, %c0_12] : memref<2x12x64xf32, #tpu.memory_space<vmem>>, vector<1x12x64xf32>
    %13 = vector.shape_cast %12 : vector<1x12x64xf32> to vector<12x64xf32>
    %14 = vector.shape_cast %11 : vector<12x64xf32> to vector<1x12x64xf32>
    tpu.vector_store %arg6[%c0_10, %c0_11, %c0_12], %14 {strides = array<i32>} : memref<2x12x64xf32, #tpu.memory_space<vmem>>, vector<1x12x64xf32>,
    %c1 = arith.constant 1 : index
    %c0_13 = arith.constant 0 : index
    %c0_14 = arith.constant 0 : index
    %15 = vector.load %arg4[%c1, %c0_13, %c0_14] : memref<2x12x32xf32, #tpu.memory_space<vmem>>, vector<1x12x32xf32>
    %16 = vector.shape_cast %15 : vector<1x12x32xf32> to vector<12x32xf32>
    %c0_15 = arith.constant 0 : index
    %c0_16 = arith.constant 0 : index
    %17 = vector.load %arg5[%c0_15, %c0_16] : memref<32x64xf32, #tpu.memory_space<vmem>>, vector<32x64xf32>
    %cst_17 = arith.constant dense<0.000000e+00> : vector<12x64xf32>
    %18 = tpu.matmul %16, %17, %cst_17 {dimension_numbers = #tpu.dot_dimension_numbers<[1], [0], [0], [1], [0, 0, 1, 1], [], []>} : vector<12x32xf32>, vector<32x64xf32>, vector<12x64xf32> -> vector<12x64xf32>
    %c1_18 = arith.constant 1 : index
    %c0_19 = arith.constant 0 : index
    %c0_20 = arith.constant 0 : index
    %19 = vector.load %arg2[%c1_18, %c0_19, %c0_20] : memref<2x1x64xf32, #tpu.memory_space<vmem>>, vector<1x1x64xf32>
    %20 = vector.shape_cast %19 : vector<1x1x64xf32> to vector<1x64xf32>
    %21 = vector.broadcast %20 : vector<1x64xf32> to vector<12x64xf32>
    %22 = arith.mulf %18, %21 : vector<12x64xf32>
    %c1_21 = arith.constant 1 : index
    %c0_22 = arith.constant 0 : index
    %c0_23 = arith.constant 0 : index
    %23 = vector.load %arg3[%c1_21, %c0_22, %c0_23] : memref<2x1x64xf32, #tpu.memory_space<vmem>>, vector<1x1x64xf32>
    %24 = vector.shape_cast %23 : vector<1x1x64xf32> to vector<1x64xf32>
    %25 = vector.broadcast %24 : vector<1x64xf32> to vector<12x64xf32>
    %26 = arith.addf %22, %25 : vector<12x64xf32>
    %c1_24 = arith.constant 1 : index
    %c0_25 = arith.constant 0 : index
    %c0_26 = arith.constant 0 : index
    %27 = vector.load %arg6[%c1_24, %c0_25, %c0_26] : memref<2x12x64xf32, #tpu.memory_space<vmem>>, vector<1x12x64xf32>
    %28 = vector.shape_cast %27 : vector<1x12x64xf32> to vector<12x64xf32>
    %29 = vector.shape_cast %26 : vector<12x64xf32> to vector<1x12x64xf32>
    tpu.vector_store %arg6[%c1_24, %c0_25, %c0_26], %29 {strides = array<i32>} : memref<2x12x64xf32, #tpu.memory_space<vmem>>, vector<1x12x64xf32>,
    return
  }
  func.func @transform_0(%arg0: i32, %arg1: i32) -> (i32, i32, i32) {
    %c0_i32 = arith.constant 0 : i32
    %c0_i32_0 = arith.constant 0 : i32
    %c0_i32_1 = arith.constant 0 : i32
    return %arg0, %c0_i32, %c0_i32_0 : i32, i32, i32
  }
  func.func @transform_1(%arg0: i32, %arg1: i32) -> (i32, i32, i32) {
    %c0_i32 = arith.constant 0 : i32
    %c0_i32_0 = arith.constant 0 : i32
    %c0_i32_1 = arith.constant 0 : i32
    return %arg0, %c0_i32, %c0_i32_0 : i32, i32, i32
  }
  func.func @transform_2(%arg0: i32, %arg1: i32) -> (i32, i32, i32) {
    %c0_i32 = arith.constant 0 : i32
    %c0_i32_0 = arith.constant 0 : i32
    return %arg0, %arg1, %c0_i32 : i32, i32, i32
  }
  func.func @transform_3(%arg0: i32, %arg1: i32) -> (i32, i32) {
    %c0_i32 = arith.constant 0 : i32
    %c0_i32_0 = arith.constant 0 : i32
    %c0_i32_1 = arith.constant 0 : i32
    return %c0_i32, %c0_i32_0 : i32, i32
  }
  func.func @transform_4(%arg0: i32, %arg1: i32) -> (i32, i32, i32) {
    %c0_i32 = arith.constant 0 : i32
    %c0_i32_0 = arith.constant 0 : i32
    return %arg0, %arg1, %c0_i32 : i32, i32, i32
  }
}

</mosaic_0001>

<llo_original>
// kernel: tpu_custom_call.1
$region0: #{tpu_custom_call.1}
  #allocation0 [shape = 'u32[]', space=smem, size = 0x4, offset = 0x4, fixed_abs, tag = 'smem constant byte address 0x4 - core index']
  #allocation1 [shape = 'u32[144,128]{1,0:T(1,128)}', space=vmem, size = 0x12000, scoped, tag = 'internal scratch']
  %s0 = inlined_call_operand.vmem [shape: f32[2,1,64], index: 0, kind: input, shape index: {}]
  %s1 = inlined_call_operand.vmem [shape: f32[2,1,64], index: 1, kind: input, shape index: {}]
  %s2 = inlined_call_operand.vmem [shape: f32[2,12,32], index: 2, kind: input, shape index: {}]
  %s3 = inlined_call_operand.vmem [shape: f32[32,64], index: 3, kind: input, shape index: {}]
  %s4 = inlined_call_operand.vmem [shape: f32[2,12,64], index: 4, kind: output, shape index: {}]
  %s5 = sld [smem:[#allocation0]]
  $region26: #{tpu_custom_call.1} parent=0
    _
  %s7 = ssub.s32 1, %s5
  %s8 = scalar_select 0, %s7, %s5
  // Predicated region
  $region2: #{tpu_custom_call.1} parent=0 // pred_check
    _
  $region3: #{tpu_custom_call.1} parent=0 // pred_check_branch
    %10 = sbr.rel (0) target = $region5
  $region4: #{tpu_custom_call.1} parent=0 // pred_region
    _
  $region5: #{tpu_custom_call.1} parent=0 // pred_fallthru
    _
  // Predicated region
  $region6: #{tpu_custom_call.1} parent=0 // pred_check
    _
  $region7: #{tpu_custom_call.1} parent=0 // pred_check_branch
    %12 = sbr.rel (0) target = $region9
  $region8: #{tpu_custom_call.1} parent=0 // pred_region
    _
  $region9: #{tpu_custom_call.1} parent=0 // pred_fallthru
    _
  // Predicated region
  $region10: #{tpu_custom_call.1} parent=0 // pred_check
    _
  $region11: #{tpu_custom_call.1} parent=0 // pred_check_branch
    %14 = sbr.rel (0) target = $region13
  $region12: #{tpu_custom_call.1} parent=0 // pred_region
    _
  $region13: #{tpu_custom_call.1} parent=0 // pred_fallthru
    _
  // Predicated region
  $region14: #{tpu_custom_call.1} parent=0 // pred_check
    _
  $region15: #{tpu_custom_call.1} parent=0 // pred_check_branch
    %16 = sbr.rel (0) target = $region17
  $region16: #{tpu_custom_call.1} parent=0 // pred_region
    _
  $region17: #{tpu_custom_call.1} parent=0 // pred_fallthru
    _
  %v17 = vld [vmem:[%s2] sm:$0xff]
  %v18 = vld [vmem:[%s2 + $0x8] sm:$0xf]
  %v19 = vld [vmem:[%s3] sm:$0xff]
  %v20 = vld [vmem:[%s3 + $0x8] sm:$0xff]
  %v21 = vld [vmem:[%s3 + $0x10] sm:$0xff]
  %v22 = vld [vmem:[%s3 + $0x18] sm:$0xff]
  %vm23 = vcmask 261120
  %v25 = vsel %vm23, %v17, 0
  %v28 = vsel %vm23, %v18, 0
  %30 = vmatprep.subr.mxu0 0.0
  %31 = vmatpush1.msra.mxu0 %v19
  %32 = vmatprep.subr.mxu0 0.0
  %33 = vmatpush1.msra.mxu0 %v20
  %34 = vmatprep.subr.mxu0 0.0
  %35 = vmatpush1.msra.mxu0 %v21
  %36 = vmatprep.subr.mxu0 0.0
  %37 = vmatpush1.msra.mxu0 %v22
  %38 = vmatprep.subr.mxu0 0.0
  %39 = vmatpush1.msra.mxu0 0.0
  %40 = vmatprep.subr.mxu0 0.0
  %41 = vmatpush1.msra.mxu0 0.0
  %42 = vmatprep.subr.mxu0 0.0
  %43 = vmatpush1.msra.mxu0 0.0
  %44 = vmatprep.subr.mxu0 0.0
  %45 = vmatpush1.msra.mxu0 0.0
  %46 = vmatprep.subr.mxu0 0.0
  %47 = vmatpush1.msra.mxu0 0.0
  %48 = vmatprep.subr.mxu0 0.0
  %49 = vmatpush1.msra.mxu0 0.0
  %50 = vmatprep.subr.mxu0 0.0
  %51 = vmatpush1.msra.mxu0 0.0
  %52 = vmatprep.subr.mxu0 0.0
  %53 = vmatpush1.msra.mxu0 0.0
  %54 = vmatprep.subr.mxu0 0.0
  %55 = vmatpush1.msra.mxu0 0.0
  %56 = vmatprep.subr.mxu0 0.0
  %57 = vmatpush1.msra.mxu0 0.0
  %58 = vmatprep.subr.mxu0 0.0
  %59 = vmatpush1.msra.mxu0 0.0
  %60 = vmatprep.subr.mxu0 0.0
  %61 = vmatpush1.msra.mxu0 0.0
  %62 = vmatprep.subr.mxu0 0.0
  %63 = vmatpush1.msra.mxu0 0.0
  %64 = vmatprep.subr.mxu0 0.0
  %65 = vmatpush1.msra.mxu0 0.0
  %66 = vmatprep.subr.mxu0 0.0
  %67 = vmatpush1.msra.mxu0 0.0
  %68 = vmatprep.subr.mxu0 0.0
  %69 = vmatpush1.msra.mxu0 0.0
  %70 = vmatprep.subr.mxu0 0.0
  %71 = vmatpush1.msra.mxu0 0.0
  %72 = vmatprep.subr.mxu0 0.0
  %73 = vmatpush1.msra.mxu0 0.0
  %74 = vmatprep.subr.mxu0 0.0
  %75 = vmatpush1.msra.mxu0 0.0
  %76 = vmatprep.subr.mxu0 0.0
  %77 = vmatpush1.msra.mxu0 0.0
  %78 = vmatprep.subr.mxu0 0.0
  %79 = vmatpush1.msra.mxu0 0.0
  %80 = vmatprep.subr.mxu0 0.0
  %81 = vmatpush1.msra.mxu0 0.0
  %82 = vmatprep.subr.mxu0 0.0
  %83 = vmatpush1.msra.mxu0 0.0
  %84 = vmatprep.subr.mxu0 0.0
  %85 = vmatpush1.msra.mxu0 0.0
  %86 = vmatprep.subr.mxu0 0.0
  %87 = vmatpush1.msra.mxu0 0.0
  %88 = vmatprep.subr.mxu0 0.0
  %89 = vmatpush1.msra.mxu0 0.0
  %90 = vmatprep.subr.mxu0 0.0
  %91 = vmatpush1.msra.mxu0 0.0
  %92 = vmatprep.subr.mxu0 0.0
  %93 = vmatpush1.msra.mxu0 0.0
  %94 = vmatprep.mubr.f32.mxu0 0.0
  %95 = vmatmul.mubr.f32.gmra.mrb[0].mxu0 %v25
  %v96 = vpop.f32.mrb[0].mxu0
  %v97 = vadd.f32 0.0, %v96
  %v98 = vpop.f32.mrb[0].mxu0
  %99 = vmatprep.mubr.f32.mxu0 0.0
  %100 = vmatmul.mubr.f32.gmra.mrb[0].mxu0 %v28
  %v101 = vpop.f32.mrb[0].mxu0
  %v102 = vadd.f32 0.0, %v101
  %v103 = vpop.f32.mrb[0].mxu0
  %104 = vdwg.mxu0
  %v105 = vld [vmem:[%s0] sm:$0x1]
  %v107 = vlaneseq
  %v108 = vshrl.u32 %v107, 7
  %v109 = vsub.s32 0, %v108
  %v110 = vrot.slane %v105, %v109
  %v112 = vmul.f32 %v97, %v110
  %v113 = vmul.f32 %v102, %v110
  %v114 = vld [vmem:[%s1] sm:$0x1]
  %v116 = vlaneseq
  %v117 = vshrl.u32 %v116, 7
  %v118 = vsub.s32 0, %v117
  %v119 = vrot.slane %v114, %v118
  %v121 = vadd.f32 %v112, %v119
  %v122 = vadd.f32 %v113, %v119
  %vm123 = vcmask 523264
  %124 = vst.msk [vmem:[%s4] sm:$0xff] %vm123, %v121
  %vm125 = vcmask 519168
  %126 = vst.msk [vmem:[%s4 + $0x8] sm:$0xf] %vm125, %v122
  %s127 = scalar_lea.vmem %s2, 16
  %v128 = vld [vmem:[%s127] sm:$0xff]
  %v129 = vld [vmem:[%s127 + $0x8] sm:$0xf]
  %v130 = vld [vmem:[%s3] sm:$0xff]
  %v131 = vld [vmem:[%s3 + $0x8] sm:$0xff]
  %v132 = vld [vmem:[%s3 + $0x10] sm:$0xff]
  %v133 = vld [vmem:[%s3 + $0x18] sm:$0xff]
  %v135 = vsel %vm23, %v128, 0
  %v138 = vsel %vm23, %v129, 0
  %140 = vmatprep.subr.mxu0 0.0
  %141 = vmatpush1.msra.mxu0 %v130
  %142 = vmatprep.subr.mxu0 0.0
  %143 = vmatpush1.msra.mxu0 %v131
  %144 = vmatprep.subr.mxu0 0.0
  %145 = vmatpush1.msra.mxu0 %v132
  %146 = vmatprep.subr.mxu0 0.0
  %147 = vmatpush1.msra.mxu0 %v133
  %148 = vmatprep.subr.mxu0 0.0
  %149 = vmatpush1.msra.mxu0 0.0
  %150 = vmatprep.subr.mxu0 0.0
  %151 = vmatpush1.msra.mxu0 0.0
  %152 = vmatprep.subr.mxu0 0.0
  %153 = vmatpush1.msra.mxu0 0.0
  %154 = vmatprep.subr.mxu0 0.0
  %155 = vmatpush1.msra.mxu0 0.0
  %156 = vmatprep.subr.mxu0 0.0
  %157 = vmatpush1.msra.mxu0 0.0
  %158 = vmatprep.subr.mxu0 0.0
  %159 = vmatpush1.msra.mxu0 0.0
  %160 = vmatprep.subr.mxu0 0.0
  %161 = vmatpush1.msra.mxu0 0.0
  %162 = vmatprep.subr.mxu0 0.0
  %163 = vmatpush1.msra.mxu0 0.0
  %164 = vmatprep.subr.mxu0 0.0
  %165 = vmatpush1.msra.mxu0 0.0
  %166 = vmatprep.subr.mxu0 0.0
  %167 = vmatpush1.msra.mxu0 0.0
  %168 = vmatprep.subr.mxu0 0.0
  %169 = vmatpush1.msra.mxu0 0.0
  %170 = vmatprep.subr.mxu0 0.0
  %171 = vmatpush1.msra.mxu0 0.0
  %172 = vmatprep.subr.mxu0 0.0
  %173 = vmatpush1.msra.mxu0 0.0
  %174 = vmatprep.subr.mxu0 0.0
  %175 = vmatpush1.msra.mxu0 0.0
  %176 = vmatprep.subr.mxu0 0.0
  %177 = vmatpush1.msra.mxu0 0.0
  %178 = vmatprep.subr.mxu0 0.0
  %179 = vmatpush1.msra.mxu0 0.0
  %180 = vmatprep.subr.mxu0 0.0
  %181 = vmatpush1.msra.mxu0 0.0
  %182 = vmatprep.subr.mxu0 0.0
  %183 = vmatpush1.msra.mxu0 0.0
  %184 = vmatprep.subr.mxu0 0.0
  %185 = vmatpush1.msra.mxu0 0.0
  %186 = vmatprep.subr.mxu0 0.0
  %187 = vmatpush1.msra.mxu0 0.0
  %188 = vmatprep.subr.mxu0 0.0
  %189 = vmatpush1.msra.mxu0 0.0
  %190 = vmatprep.subr.mxu0 0.0
  %191 = vmatpush1.msra.mxu0 0.0
  %192 = vmatprep.subr.mxu0 0.0
  %193 = vmatpush1.msra.mxu0 0.0
  %194 = vmatprep.subr.mxu0 0.0
  %195 = vmatpush1.msra.mxu0 0.0
  %196 = vmatprep.subr.mxu0 0.0
  %197 = vmatpush1.msra.mxu0 0.0
  %198 = vmatprep.subr.mxu0 0.0
  %199 = vmatpush1.msra.mxu0 0.0
  %200 = vmatprep.subr.mxu0 0.0
  %201 = vmatpush1.msra.mxu0 0.0
  %202 = vmatprep.subr.mxu0 0.0
  %203 = vmatpush1.msra.mxu0 0.0
  %204 = vmatprep.mubr.f32.mxu0 0.0
  %205 = vmatmul.mubr.f32.gmra.mrb[0].mxu0 %v135
  %v206 = vpop.f32.mrb[0].mxu0
  %v207 = vadd.f32 0.0, %v206
  %v208 = vpop.f32.mrb[0].mxu0
  %209 = vmatprep.mubr.f32.mxu0 0.0
  %210 = vmatmul.mubr.f32.gmra.mrb[0].mxu0 %v138
  %v211 = vpop.f32.mrb[0].mxu0
  %v212 = vadd.f32 0.0, %v211
  %v213 = vpop.f32.mrb[0].mxu0
  %214 = vdwg.mxu0
  %s215 = scalar_lea.vmem %s0, 1
  %v216 = vld [vmem:[%s215] sm:$0x1]
  %v218 = vlaneseq
  %v219 = vshrl.u32 %v218, 7
  %v220 = vsub.s32 0, %v219
  %v221 = vrot.slane %v216, %v220
  %v223 = vmul.f32 %v207, %v221
  %v224 = vmul.f32 %v212, %v221
  %s225 = scalar_lea.vmem %s1, 1
  %v226 = vld [vmem:[%s225] sm:$0x1]
  %v228 = vlaneseq
  %v229 = vshrl.u32 %v228, 7
  %v230 = vsub.s32 0, %v229
  %v231 = vrot.slane %v226, %v230
  %v233 = vadd.f32 %v223, %v231
  %v234 = vadd.f32 %v224, %v231
  %s235 = scalar_lea.vmem %s4, 16
  %236 = vst.msk [vmem:[%s235] sm:$0xff] %vm123, %v233
  %237 = vst.msk [vmem:[%s235 + $0x8] sm:$0xf] %vm125, %v234
  // Predicated region
  $region18: #{tpu_custom_call.1} parent=0 // pred_check
    _
  $region19: #{tpu_custom_call.1} parent=0 // pred_check_branch
    %239 = sbr.rel (0) target = $region21
  $region20: #{tpu_custom_call.1} parent=0 // pred_region
    _
  $region21: #{tpu_custom_call.1} parent=0 // pred_fallthru
    _
  // Predicated region
  $region22: #{tpu_custom_call.1} parent=0 // pred_check
    _
  $region23: #{tpu_custom_call.1} parent=0 // pred_check_branch
    %241 = sbr.rel (0) target = $region25
  $region24: #{tpu_custom_call.1} parent=0 // pred_region
    _
  $region25: #{tpu_custom_call.1} parent=0 // pred_fallthru
    _

</llo_original>
